<compile_context>
chip_gen: v6e
topology: v6e:2x2x1
jax: 0.10.0
libtpu: 0.0.40
codegen_flags: <defaults>
</compile_context>

<pallas_src>
import functools

import jax
import jax.numpy as jnp
from jax.experimental import pallas as pl
from jax.experimental.pallas import tpu as pltpu


def _round_up(n, m):
    return (n + m - 1) // m * m


# --------------------------------------------------------------------------- #
# Kernel
# --------------------------------------------------------------------------- #
def density_kernel(a_ref, w_ref, o_ref, *, num_distr, block_o):
    """One (batch tile, output tile) of the eval-mode forward.

    a_ref : (tb, Fa_pad)         fused activations [x^2, x, 1, 0-pad]
    w_ref : (Fa_pad, K*block_o)  fused weight slab (exp negation pre-folded)
    o_ref : (tb, block_o)        output probabilities
    """
    a = a_ref[...]
    w = w_ref[...]

    # -e[b, k*block_o + o] in one MXU dot; f32 accumulation regardless of
    # operand dtype (bf16 operands are fine, accumulation stays f32).
    e = jnp.dot(a, w, preferred_element_type=jnp.float32)      # (tb, K*block_o)

    # Per-distribution running sum / max, accumulated per k-slice so only
    # (tb, block_o)-sized temporaries stay live; exp goes to the EUP slot.
    p = jnp.exp(e[:, :block_o])
    s = p
    m = p
    for k in range(1, num_distr):                               # K tiny & static
        pk = jnp.exp(e[:, k * block_o:(k + 1) * block_o])
        s = s + pk
        m = jnp.maximum(m, pk)

    # eval branch:  out = sum_k p / (sum_k p + K - K * max_k p)
    kf = jnp.float32(num_distr)
    o_ref[...] = (s * pl.reciprocal(s + kf - kf * m, approx=True)
                  ).astype(o_ref.dtype)
    # TODO(synk): training branch ((max*(K+1) - sum)/K) not emitted since
    # self.training is hard-coded False in the reference module.


# --------------------------------------------------------------------------- #
# One-time parameter packing (hoist / cache for inference)
# --------------------------------------------------------------------------- #
def prepare_density_params(mean, rho, *, block_o=None, mxu_dtype=jnp.float32):
    """mean, rho: (O, K, F)  ->  (slab, meta).

    slab: (Fa_pad, n_otiles * K * block_o) fused weight matrix such that
    [x^2, x, 1] @ slab == -(x - mean)^2 / (2 sigma^2) summed over features,
    columns laid out o-tile-major, then k, then o-within-tile (all 128-aligned).
    Zero padding stays exactly zero (also in bf16), so padded lanes compute a
    finite 1.0 and are sliced off by the caller.
    """
    O, K, F = mean.shape
    assert rho.shape == mean.shape
    O_pad = _round_up(O, 128)                  # lane-dense MXU N dimension
    if block_o is None:
        block_o = O_pad                        # single fused dot (default)
    assert block_o % 128 == 0 and O_pad % block_o == 0
    n_otiles = O_pad // block_o

    mean = mean.astype(jnp.float32)
    sigma = jax.nn.softplus(rho.astype(jnp.float32))            # stable softplus
    w = 0.5 / (sigma * sigma)                                   # 1/(2 sigma^2)

    w_quad = -w                                                 # pairs with x^2
    w_lin = 2.0 * mean * w                                      # pairs with x
    w_bias = -jnp.sum(mean * mean * w, axis=-1)                 # pairs with 1, (O,K)

    Fa = 2 * F + 1
    Fa_pad = _round_up(Fa, 128)

    def pack_fk(t):   # (O, K, F) -> (F, n_otiles, K, block_o)
        t = jnp.transpose(t, (2, 1, 0))                         # (F, K, O)
        t = jnp.pad(t, ((0, 0), (0, 0), (0, O_pad - O)))
        t = t.reshape(F, K, n_otiles, block_o)
        return jnp.transpose(t, (0, 2, 1, 3))

    wb = jnp.pad(w_bias.T, ((0, 0), (0, O_pad - O)))            # (K, O_pad)
    wb = jnp.transpose(wb.reshape(K, n_otiles, block_o), (1, 0, 2))

    slab = jnp.zeros((Fa_pad, n_otiles, K, block_o), jnp.float32)
    slab = slab.at[:F].set(pack_fk(w_quad))
    slab = slab.at[F:2 * F].set(pack_fk(w_lin))
    slab = slab.at[2 * F].set(wb)
    slab = slab.reshape(Fa_pad, n_otiles * K * block_o).astype(mxu_dtype)

    meta = dict(F=F, K=K, O=O, O_pad=O_pad, block_o=block_o,
                n_otiles=n_otiles, Fa=Fa, Fa_pad=Fa_pad)
    return slab, meta


# --------------------------------------------------------------------------- #
# Per-call forward
# --------------------------------------------------------------------------- #
def density_estimator_apply(x, slab, meta, *, block_b=None):
    """x: (B, F) -> (B, O) float32, eval-mode forward."""
    B, F = x.shape
    assert F == meta["F"]
    K, O, O_pad = meta["K"], meta["O"], meta["O_pad"]
    block_o, n_otiles = meta["block_o"], meta["n_otiles"]
    Fa, Fa_pad = meta["Fa"], meta["Fa_pad"]

    # Batch tiling: one big tile on single-TC parts (v5e/v6e); 256-row tiles
    # (>=2 grid steps, MXU-shaped) once the batch is large enough for megacore.
    if block_b is None:
        block_b = _round_up(B, 8) if B <= 512 else 256
    B_pad = _round_up(B, block_b)

    # Fused activation matrix A = [x^2, x, 1, 0-pad], built in the wrapper so
    # the kernel needs a single lane-aligned dot.
    xf = x.astype(jnp.float32)
    a = jnp.concatenate([xf * xf, xf, jnp.ones((B, 1), jnp.float32)], axis=-1)
    a = jnp.pad(a, ((0, B_pad - B), (0, Fa_pad - Fa))).astype(slab.dtype)

    # Explicit VMEM budget for the chosen tiling.
    itemsize = jnp.dtype(slab.dtype).itemsize
    w_bufs = 1 if n_otiles == 1 else 2
    vmem_bytes = (w_bufs * Fa_pad * K * block_o * itemsize       # weight slab
                  + 2 * block_b * Fa_pad * itemsize              # A tile x2
                  + 2 * block_b * block_o * 4                    # out tile x2
                  + 2 * block_b * K * block_o * 4                # e / s / m temps
                  + (4 << 20))                                   # headroom
    vmem_bytes = int(min(max(vmem_bytes, 32 << 20), 96 << 20))

    if n_otiles == 1:
        # Grid-invariant weights: single-buffer (DMA'd once, half the VMEM).
        w_spec = pl.BlockSpec((Fa_pad, K * block_o), lambda i, j: (0, j),
                              pipeline_mode=pl.Buffered(1))
    else:
        w_spec = pl.BlockSpec((Fa_pad, K * block_o), lambda i, j: (0, j))

    kernel = functools.partial(density_kernel, num_distr=K, block_o=block_o)
    out = pl.pallas_call(
        kernel,
        out_shape=jax.ShapeDtypeStruct((B_pad, O_pad), jnp.float32),
        grid_spec=pltpu.PrefetchScalarGridSpec(
            num_scalar_prefetch=0,
            grid=(B_pad // block_b, n_otiles),
            in_specs=[
                pl.BlockSpec((block_b, Fa_pad), lambda i, j: (i, 0)),
                w_spec,
            ],
            out_specs=pl.BlockSpec((block_b, block_o), lambda i, j: (i, j)),
        ),
        compiler_params=pltpu.CompilerParams(
            dimension_semantics=("parallel", "parallel"),
            vmem_limit_bytes=vmem_bytes),
    )(a, slab)
    return out[:B, :O]


def density_estimator_forward(x, mean, rho, *, block_o=None,
                              mxu_dtype=jnp.float32, block_b=None):
    """Convenience one-shot API (prep is re-done per call; cache it for inference)."""
    slab, meta = prepare_density_params(mean, rho, block_o=block_o,
                                        mxu_dtype=mxu_dtype)
    return density_estimator_apply(x, slab, meta, block_b=block_b)


# --------------------------------------------------------------------------- #
# Pure-JAX reference (transcription of the PyTorch forward, eval branch)
# --------------------------------------------------------------------------- #
def reference_forward(x, mean, rho):
    sigma = jax.nn.softplus(rho)                                  # (O,K,F)
    diff = x[:, None, None, :] - mean[None]                       # (B,O,K,F)
    est = diff * diff / (2.0 * sigma * sigma)[None]               # (B,O,K,F)
    p = jnp.exp(-jnp.sum(est, axis=-1))                           # (B,O,K)
    s = jnp.sum(p, axis=-1)
    m = jnp.max(p, axis=-1)
    K = mean.shape[1]
    return s / (s + K - K * m)                                    # (B,O)


if __name__ == "__main__":
    B, F, O, K = 16, 32, 16, 2   # batch, in_features, out_features, num_distr
    key = jax.random.PRNGKey(0)
    kx, km, kr = jax.random.split(key, 3)
    x = jax.random.normal(kx, (B, F), dtype=jnp.float32)
    # torch.rand -> uniform [0, 1) init for mean and rho
    mean = jax.random.uniform(km, (O, K, F), dtype=jnp.float32)
    rho = jax.random.uniform(kr, (O, K, F), dtype=jnp.float32)

    ref = reference_forward(x, mean, rho)

    # 1) f32 MXU operands (exact-ish path); params prepped once and reused.
    slab32, meta32 = prepare_density_params(mean, rho, mxu_dtype=jnp.float32)
    out32 = jax.block_until_ready(density_estimator_apply(x, slab32, meta32))
    assert out32.shape == (B, O), out32.shape
    err32 = float(jnp.max(jnp.abs(out32 - ref)))
    assert jnp.allclose(out32, ref, atol=2e-4, rtol=2e-3), err32

    # 2) bf16 MXU operands (perf-review path, f32 accumulation) — looser check
    #    because the quadratic expansion is cancellation-sensitive in bf16.
    slab16, meta16 = prepare_density_params(mean, rho, mxu_dtype=jnp.bfloat16)
    out16 = jax.block_until_ready(density_estimator_apply(x, slab16, meta16))
    err16 = float(jnp.max(jnp.abs(out16 - ref)))
    assert jnp.allclose(out16, ref, atol=2e-2), err16

    # 3) O-tiled path (second grid axis over output features), as used for
    #    large O*K on v7x's 64 MiB VMEM.
    O2 = 200
    km2, kr2 = jax.random.split(jax.random.PRNGKey(1))
    mean2 = jax.random.uniform(km2, (O2, K, F), dtype=jnp.float32)
    rho2 = jax.random.uniform(kr2, (O2, K, F), dtype=jnp.float32)
    slab2, meta2 = prepare_density_params(mean2, rho2, block_o=128,
                                          mxu_dtype=jnp.bfloat16)
    out2 = jax.block_until_ready(density_estimator_apply(x, slab2, meta2))
    ref2 = reference_forward(x, mean2, rho2)
    assert out2.shape == (B, O2), out2.shape
    err2 = float(jnp.max(jnp.abs(out2 - ref2)))
    assert jnp.allclose(out2, ref2, atol=2e-2), err2

    print("KERNEL_OK")
</pallas_src>

<mosaic_0001>
module attributes {stable_mosaic.version = 11 : i64} {
  func.func @density_kernel(%arg0: i32, %arg1: i32, %arg2: memref<16x128xf32, #tpu.memory_space<vmem>>, %arg3: memref<128x256xf32, #tpu.memory_space<vmem>>, %arg4: memref<16x128xf32, #tpu.memory_space<vmem>>) attributes {dimension_semantics = [#tpu.dimension_semantics<parallel>, #tpu.dimension_semantics<parallel>], iteration_bounds = array<i64: 1, 1>, scalar_prefetch = 0 : i64, scratch_operands = 0 : i64, tpu.core_type = #tpu.core_type<tc>, window_params = [{transform_indices = @transform_0, window_bounds = array<i64: 16, 128>}, {pipeline_mode = #tpu.pipeline_mode<synchronous>, transform_indices = @transform_1, window_bounds = array<i64: 128, 256>}, {transform_indices = @transform_2, window_bounds = array<i64: 16, 128>}]} {
    %c0 = arith.constant 0 : index
    %c0_0 = arith.constant 0 : index
    %0 = vector.load %arg2[%c0, %c0_0] : memref<16x128xf32, #tpu.memory_space<vmem>>, vector<16x128xf32>
    %c0_1 = arith.constant 0 : index
    %c0_2 = arith.constant 0 : index
    %1 = vector.load %arg3[%c0_1, %c0_2] : memref<128x256xf32, #tpu.memory_space<vmem>>, vector<128x256xf32>
    %cst = arith.constant dense<0.000000e+00> : vector<16x256xf32>
    %2 = tpu.matmul %0, %1, %cst {dimension_numbers = #tpu.dot_dimension_numbers<[1], [0], [0], [1], [0, 0, 1, 1], [], []>} : vector<16x128xf32>, vector<128x256xf32>, vector<16x256xf32> -> vector<16x256xf32>
    %3 = vector.extract_strided_slice %2 {offsets = [0, 0], sizes = [16, 128], strides = [1, 1]} : vector<16x256xf32> to vector<16x128xf32>
    %4 = math.exp %3 : vector<16x128xf32>
    %5 = vector.extract_strided_slice %2 {offsets = [0, 128], sizes = [16, 128], strides = [1, 1]} : vector<16x256xf32> to vector<16x128xf32>
    %6 = math.exp %5 : vector<16x128xf32>
    %7 = arith.addf %4, %6 : vector<16x128xf32>
    %8 = arith.maximumf %4, %6 : vector<16x128xf32>
    %cst_3 = arith.constant 2.000000e+00 : f32
    %9 = vector.broadcast %cst_3 : f32 to vector<16x128xf32>
    %10 = arith.addf %7, %9 : vector<16x128xf32>
    %cst_4 = arith.constant 2.000000e+00 : f32
    %11 = vector.broadcast %cst_4 : f32 to vector<16x128xf32>
    %12 = arith.mulf %11, %8 : vector<16x128xf32>
    %13 = arith.subf %10, %12 : vector<16x128xf32>
    %14 = tpu.reciprocal %13 {approx = true} : vector<16x128xf32> -> vector<16x128xf32>
    %15 = arith.mulf %7, %14 : vector<16x128xf32>
    %c0_5 = arith.constant 0 : index
    %c0_6 = arith.constant 0 : index
    %16 = vector.load %arg4[%c0_5, %c0_6] : memref<16x128xf32, #tpu.memory_space<vmem>>, vector<16x128xf32>
    tpu.vector_store %arg4[%c0_5, %c0_6], %15 {strides = array<i32>} : memref<16x128xf32, #tpu.memory_space<vmem>>, vector<16x128xf32>,
    return
  }
  func.func @transform_0(%arg0: i32, %arg1: i32) -> (i32, i32) {
    %c0_i32 = arith.constant 0 : i32
    %c0_i32_0 = arith.constant 0 : i32
    return %arg0, %c0_i32 : i32, i32
  }
  func.func @transform_1(%arg0: i32, %arg1: i32) -> (i32, i32) {
    %c0_i32 = arith.constant 0 : i32
    %c0_i32_0 = arith.constant 0 : i32
    return %c0_i32, %arg1 : i32, i32
  }
  func.func @transform_2(%arg0: i32, %arg1: i32) -> (i32, i32) {
    %c0_i32 = arith.constant 0 : i32
    return %arg0, %arg1 : i32, i32
  }
}

</mosaic_0001>

<llo_original>
// kernel: tpu_custom_call.1
$region0: #{tpu_custom_call.1}
  #allocation0 [shape = 'u32[]', space=smem, size = 0x4, offset = 0x4, fixed_abs, tag = 'smem constant byte address 0x4 - core index']
  #allocation1 [shape = 'u32[144,128]{1,0:T(1,128)}', space=vmem, size = 0x12000, scoped, tag = 'internal scratch']
  %s0 = inlined_call_operand.hbm [shape: f32[16,128], index: 0, kind: input, shape index: {}]
  %s1 = inlined_call_operand.hbm [shape: f32[128,256], index: 1, kind: input, shape index: {}]
  %s2 = inlined_call_operand.hbm [shape: f32[16,128], index: 2, kind: output, shape index: {}]
  %s3 = sld [smem:[#allocation0]]
  $region26: #{tpu_custom_call.1} parent=0
    _
  %s5 = ssub.s32 1, %s3
  %s6 = scalar_select 0, %s5, %s3
  $region1: #{tpu_custom_call.1} parent=0
    #allocation2 [shape = 'u8[8192]{0}', space=vmem, size = 0x2000, scoped, tag = 'input window, operand 0, single buffered']
    #allocation3 [shape = 's32[1]{0}', space=sflag, size = 0x4, scoped, tag = 'scoped memory for tpu_custom_call.1']
    #allocation4 [shape = 's32[1]{0}', space=sflag, size = 0x4, scoped, tag = 'scoped memory for tpu_custom_call.1']
    #allocation5 [shape = 'u8[131072]{0}', space=vmem, size = 0x20000, scoped, tag = 'input window, operand 1, single buffered']
    #allocation6 [shape = 's32[1]{0}', space=sflag, size = 0x4, scoped, tag = 'scoped memory for tpu_custom_call.1']
    #allocation7 [shape = 'u8[8192]{0}', space=vmem, size = 0x2000, scoped, tag = 'output window, operand 0, single buffered']
    %7 = vsyncpa [#allocation3], 0
    %8 = vsyncpa [#allocation6], 0
    %9 = vsyncpa [#allocation4], 0
    // Predicated region
    $region2: #{tpu_custom_call.1} parent=1 // pred_check
      _
    $region3: #{tpu_custom_call.1} parent=1 // pred_check_branch
      %11 = sbr.rel (0) target = $region5
    $region4: #{tpu_custom_call.1} parent=1 // pred_region
      %s13 = ssub.s32 256, 256
      %14 = vsyncadd [#allocation3], %s13
      %s15 = sshll.u32 [#allocation2], 4
      %s16 = int_to_ptr.vmem [resolvable:$true] %s15
      %21 = dma.hbm_to_vmem [thread:$0]  %s0, 256, %s16, [#allocation3], 128, 128, 8
    $region5: #{tpu_custom_call.1} parent=1 // pred_fallthru
      _
    // Predicated region
    $region6: #{tpu_custom_call.1} parent=1 // pred_check
      _
    $region7: #{tpu_custom_call.1} parent=1 // pred_check_branch
      %23 = sbr.rel (0) target = $region9
    $region8: #{tpu_custom_call.1} parent=1 // pred_region
      %s25 = ssub.s32 4096, 4096
      %26 = vsyncadd [#allocation6], %s25
      %s27 = sshll.u32 [#allocation5], 4
      %s28 = int_to_ptr.vmem [resolvable:$true] %s27
      %33 = dma.hbm_to_vmem [thread:$0]  %s1, 4096, %s28, [#allocation6], 256, 256, 16
    $region9: #{tpu_custom_call.1} parent=1 // pred_fallthru
      _
    // Predicated region
    $region10: #{tpu_custom_call.1} parent=1 // pred_check
      _
    $region11: #{tpu_custom_call.1} parent=1 // pred_check_branch
      %35 = sbr.rel (0) target = $region13
    $region12: #{tpu_custom_call.1} parent=1 // pred_region
      %36 = dma.done [#allocation3], 256
    $region13: #{tpu_custom_call.1} parent=1 // pred_fallthru
      _
    // Predicated region
    $region14: #{tpu_custom_call.1} parent=1 // pred_check
      _
    $region15: #{tpu_custom_call.1} parent=1 // pred_check_branch
      %38 = sbr.rel (0) target = $region17
    $region16: #{tpu_custom_call.1} parent=1 // pred_region
      %39 = dma.done [#allocation6], 4096
    $region17: #{tpu_custom_call.1} parent=1 // pred_fallthru
      _
    %v40 = vld [vmem:[#allocation2] sm:$0xff]
    %v41 = vld [vmem:[#allocation2 + $0x8] sm:$0xff]
    %v42 = vld [vmem:[#allocation5] sm:$0xff]
    %v43 = vld [vmem:[#allocation5 + $0x8] sm:$0xff]
    %v44 = vld [vmem:[#allocation5 + $0x10] sm:$0xff]
    %v45 = vld [vmem:[#allocation5 + $0x18] sm:$0xff]
    %v46 = vld [vmem:[#allocation5 + $0x20] sm:$0xff]
    %v47 = vld [vmem:[#allocation5 + $0x28] sm:$0xff]
    %v48 = vld [vmem:[#allocation5 + $0x30] sm:$0xff]
    %v49 = vld [vmem:[#allocation5 + $0x38] sm:$0xff]
    %v50 = vld [vmem:[#allocation5 + $0x40] sm:$0xff]
    %v51 = vld [vmem:[#allocation5 + $0x48] sm:$0xff]
    %v52 = vld [vmem:[#allocation5 + $0x50] sm:$0xff]
    %v53 = vld [vmem:[#allocation5 + $0x58] sm:$0xff]
    %v54 = vld [vmem:[#allocation5 + $0x60] sm:$0xff]
    %v55 = vld [vmem:[#allocation5 + $0x68] sm:$0xff]
    %v56 = vld [vmem:[#allocation5 + $0x70] sm:$0xff]
    %v57 = vld [vmem:[#allocation5 + $0x78] sm:$0xff]
    %v58 = vld [vmem:[#allocation5 + $0x80] sm:$0xff]
    %v59 = vld [vmem:[#allocation5 + $0x88] sm:$0xff]
    %v60 = vld [vmem:[#allocation5 + $0x90] sm:$0xff]
    %v61 = vld [vmem:[#allocation5 + $0x98] sm:$0xff]
    %v62 = vld [vmem:[#allocation5 + $0xa0] sm:$0xff]
    %v63 = vld [vmem:[#allocation5 + $0xa8] sm:$0xff]
    %v64 = vld [vmem:[#allocation5 + $0xb0] sm:$0xff]
    %v65 = vld [vmem:[#allocation5 + $0xb8] sm:$0xff]
    %v66 = vld [vmem:[#allocation5 + $0xc0] sm:$0xff]
    %v67 = vld [vmem:[#allocation5 + $0xc8] sm:$0xff]
    %v68 = vld [vmem:[#allocation5 + $0xd0] sm:$0xff]
    %v69 = vld [vmem:[#allocation5 + $0xd8] sm:$0xff]
    %v70 = vld [vmem:[#allocation5 + $0xe0] sm:$0xff]
    %v71 = vld [vmem:[#allocation5 + $0xe8] sm:$0xff]
    %v72 = vld [vmem:[#allocation5 + $0xf0] sm:$0xff]
    %v73 = vld [vmem:[#allocation5 + $0xf8] sm:$0xff]
    %74 = vmatprep.subr.mxu0 %v73
    %75 = vmatpush1.msra.mxu0 %v72
    %76 = vmatprep.subr.mxu0 %v71
    %77 = vmatpush1.msra.mxu0 %v70
    %78 = vmatprep.subr.mxu0 %v69
    %79 = vmatpush1.msra.mxu0 %v68
    %80 = vmatprep.subr.mxu0 %v67
    %81 = vmatpush1.msra.mxu0 %v66
    %82 = vmatprep.subr.mxu0 %v65
    %83 = vmatpush1.msra.mxu0 %v64
    %84 = vmatprep.subr.mxu0 %v63
    %85 = vmatpush1.msra.mxu0 %v62
    %86 = vmatprep.subr.mxu0 %v61
    %87 = vmatpush1.msra.mxu0 %v60
    %88 = vmatprep.subr.mxu0 %v59
    %89 = vmatpush1.msra.mxu0 %v58
    %90 = vmatprep.subr.mxu0 %v57
    %91 = vmatpush1.msra.mxu0 %v56
    %92 = vmatprep.subr.mxu0 %v55
    %93 = vmatpush1.msra.mxu0 %v54
    %94 = vmatprep.subr.mxu0 %v53
    %95 = vmatpush1.msra.mxu0 %v52
    %96 = vmatprep.subr.mxu0 %v51
    %97 = vmatpush1.msra.mxu0 %v50
    %98 = vmatprep.subr.mxu0 %v49
    %99 = vmatpush1.msra.mxu0 %v48
    %100 = vmatprep.subr.mxu0 %v47
    %101 = vmatpush1.msra.mxu0 %v46
    %102 = vmatprep.subr.mxu0 %v45
    %103 = vmatpush1.msra.mxu0 %v44
    %104 = vmatprep.subr.mxu0 %v43
    %105 = vmatpush1.msra.mxu0 %v42
    %106 = vmatprep.subr.mxu0 0.0
    %107 = vmatpush2.msra.mxu0 0.0
    %108 = vmatprep.subr.mxu0 0.0
    %109 = vmatpush2.msra.mxu0 0.0
    %110 = vmatprep.subr.mxu0 0.0
    %111 = vmatpush2.msra.mxu0 0.0
    %112 = vmatprep.subr.mxu0 0.0
    %113 = vmatpush2.msra.mxu0 0.0
    %114 = vmatprep.subr.mxu0 0.0
    %115 = vmatpush2.msra.mxu0 0.0
    %116 = vmatprep.subr.mxu0 0.0
    %117 = vmatpush2.msra.mxu0 0.0
    %118 = vmatprep.subr.mxu0 0.0
    %119 = vmatpush2.msra.mxu0 0.0
    %120 = vmatprep.subr.mxu0 0.0
    %121 = vmatpush2.msra.mxu0 0.0
    %122 = vmatprep.subr.mxu0 0.0
    %123 = vmatpush2.msra.mxu0 0.0
    %124 = vmatprep.subr.mxu0 0.0
    %125 = vmatpush2.msra.mxu0 0.0
    %126 = vmatprep.subr.mxu0 0.0
    %127 = vmatpush2.msra.mxu0 0.0
    %128 = vmatprep.subr.mxu0 0.0
    %129 = vmatpush2.msra.mxu0 0.0
    %130 = vmatprep.subr.mxu0 0.0
    %131 = vmatpush2.msra.mxu0 0.0
    %132 = vmatprep.subr.mxu0 0.0
    %133 = vmatpush2.msra.mxu0 0.0
    %134 = vmatprep.subr.mxu0 0.0
    %135 = vmatpush2.msra.mxu0 0.0
    %136 = vmatprep.subr.mxu0 0.0
    %137 = vmatpush2.msra.mxu0 0.0
    %138 = vmatprep.mubr.f32.mxu0 0.0
    %139 = vmatmul.mubr.f32.gmra.mxu0 %v40
    %v140 = vpop.f32.mrf.mxu0
    %v141 = vadd.f32 0.0, %v140
    %v142 = vpop.f32.mrf.mxu0
    %v143 = vadd.f32 0.0, %v142
    %144 = vmatprep.mubr.f32.mxu0 0.0
    %145 = vmatmul.mubr.f32.gmra.mxu0 %v41
    %v146 = vpop.f32.mrf.mxu0
    %v147 = vadd.f32 0.0, %v146
    %v148 = vpop.f32.mrf.mxu0
    %v149 = vadd.f32 0.0, %v148
    %150 = vdwg.mxu0
    %v151 = vmul.f32 %v141, 1.442695
    %v152 = vpow.pop %v151
    %v153 = vmul.f32 %v147, 1.442695
    %v154 = vpow.pop %v153
    %v155 = vmul.f32 %v143, 1.442695
    %v156 = vpow.pop %v155
    %v157 = vmul.f32 %v149, 1.442695
    %v158 = vpow.pop %v157
    %v159 = vadd.f32 %v152, %v156
    %v160 = vadd.f32 %v154, %v158
    %v161 = vmax.f32 %v152, %v156
    %v162 = vmax.f32 %v154, %v158
    %v163 = vadd.f32 %v159, 2.0
    %v164 = vadd.f32 %v160, 2.0
    %v165 = vmul.f32 %v161, 2.0
    %v166 = vmul.f32 %v162, 2.0
    %v167 = vsub.f32 %v163, %v165
    %v168 = vsub.f32 %v164, %v166
    %v169 = vrcp.pop %v167
    %v170 = vrcp.pop %v168
    %v171 = vmul.f32 %v159, %v169
    %v172 = vmul.f32 %v160, %v170
    %173 = vst [vmem:[#allocation7] sm:$0xff] %v171
    %174 = vst [vmem:[#allocation7 + $0x8] sm:$0xff] %v172
    // Predicated region
    $region18: #{tpu_custom_call.1} parent=1 // pred_check
      _
    $region19: #{tpu_custom_call.1} parent=1 // pred_check_branch
      %176 = sbr.rel (0) target = $region21
    $region20: #{tpu_custom_call.1} parent=1 // pred_region
      %s178 = ssub.s32 256, 256
      %179 = vsyncadd [#allocation4], %s178
      %s180 = sshll.u32 [#allocation7], 4
      %s181 = int_to_ptr.vmem [resolvable:$true] %s180
      %186 = dma.vmem_to_hbm [thread:$0]  %s181, 256, %s2, [#allocation4], 128, 128, 8
    $region21: #{tpu_custom_call.1} parent=1 // pred_fallthru
      _
    // Predicated region
    $region22: #{tpu_custom_call.1} parent=1 // pred_check
      _
    $region23: #{tpu_custom_call.1} parent=1 // pred_check_branch
      %188 = sbr.rel (0) target = $region25
    $region24: #{tpu_custom_call.1} parent=1 // pred_region
      %189 = dma.done [#allocation4], 256
    $region25: #{tpu_custom_call.1} parent=1 // pred_fallthru
      _
    %190 = vsyncpa [#allocation3], 1
    %191 = vsyncpa [#allocation6], 1
    %192 = vsyncpa [#allocation4], 1

</llo_original>
